<compile_context>
chip_gen: v6e
topology: v6e:2x2x1
jax: 0.10.0
libtpu: 0.0.40
codegen_flags: <defaults>
</compile_context>

<pallas_src>
import jax
import jax.numpy as jnp
from jax.experimental import pallas as pl
from jax.experimental.pallas import tpu as pltpu

IN_DIM = 10 * 14 * 2      # 280 real input features
IN_PAD = 384              # padded to a multiple of 128 for clean MXU / vreg K tiles
H1 = 256
H2 = 128
OUT_DIM = 10              # real output width
OUT_PAD = 128             # lane-dense output (unmasked vst), sliced in wrapper


def mlp_kernel(x_ref, w1_ref, b1_ref, w2_ref, b2_ref, w3_ref, b3_ref, o_ref):
    # Three MXU matmuls (bf16 in, f32 accumulate) + VPU bias/ReLU, fused in VMEM.
    h1 = jnp.dot(x_ref[...], w1_ref[...], preferred_element_type=jnp.float32)
    h1 = jnp.maximum(h1 + b1_ref[...], 0.0).astype(jnp.bfloat16)

    h2 = jnp.dot(h1, w2_ref[...], preferred_element_type=jnp.float32)
    h2 = jnp.maximum(h2 + b2_ref[...], 0.0).astype(jnp.bfloat16)

    out = jnp.dot(h2, w3_ref[...], preferred_element_type=jnp.float32) + b3_ref[...]
    o_ref[...] = out.astype(o_ref.dtype)


def mlp_forward(x, params, *, block_b=512):
    """x: (B, 10, 14, 2) or (B, 280), any float dtype. Returns (B, 10) float32."""
    w1, b1, w2, b2, w3, b3 = params

    x2d = x.reshape(-1, IN_DIM)
    B = x2d.shape[0]

    # Zero-pad K to 384 and cast to bf16 once in the wrapper (single XLA fusion).
    x_pad = jnp.pad(x2d, ((0, 0), (0, IN_PAD - IN_DIM))).astype(jnp.bfloat16)

    # Fixed batch tile (multiple of 8); clamp for tiny demo batches.
    block_b = max(8, min(block_b, ((B + 7) // 8) * 8))
    grid = (pl.cdiv(B, block_b),)

    # Explicit VMEM budget: double-buffered x/out tiles + (double-buffered)
    # weights/biases + f32 intermediates, plus headroom.  Weights are tiny
    # (~0.3 MiB bf16), so their constant-index double buffers are negligible;
    # pipeline_mode=pl.Buffered(1) intentionally skipped for lowering safety.
    x_tile_b = block_b * IN_PAD * 2                       # bf16
    out_tile_b = block_b * OUT_PAD * 4                    # f32
    weights_b = (IN_PAD * H1 + H1 * H2 + H2 * OUT_PAD) * 2 \
                + (H1 + H2 + OUT_PAD) * 4
    interm_b = block_b * (H1 + H2 + OUT_PAD) * 4          # h1/h2/out live values
    vmem_limit = 2 * x_tile_b + 2 * out_tile_b + 2 * weights_b + interm_b + (8 << 20)
    vmem_limit = int(min(max(vmem_limit, 16 << 20), 48 << 20))

    # Weights/biases use a constant index_map -> held resident across the batch grid.
    def wmap(i):
        return (0, 0)

    out_pad = pl.pallas_call(
        mlp_kernel,
        out_shape=jax.ShapeDtypeStruct((B, OUT_PAD), jnp.float32),
        grid_spec=pltpu.PrefetchScalarGridSpec(
            num_scalar_prefetch=0,
            grid=grid,
            in_specs=[
                pl.BlockSpec((block_b, IN_PAD), lambda i: (i, 0)),
                pl.BlockSpec((IN_PAD, H1), wmap),
                pl.BlockSpec((1, H1), wmap),
                pl.BlockSpec((H1, H2), wmap),
                pl.BlockSpec((1, H2), wmap),
                pl.BlockSpec((H2, OUT_PAD), wmap),
                pl.BlockSpec((1, OUT_PAD), wmap),
            ],
            out_specs=pl.BlockSpec((block_b, OUT_PAD), lambda i: (i, 0)),
        ),
        compiler_params=pltpu.CompilerParams(
            dimension_semantics=("parallel",),
            vmem_limit_bytes=vmem_limit,
        ),
    )(x_pad, w1, b1, w2, b2, w3, b3)

    # Drop the lane padding: only the first 10 output columns are real.
    return out_pad[:, :OUT_DIM]


def init_params(key):
    """Deterministic init mimicking torch.nn.Linear (uniform +/- 1/sqrt(fan_in)).

    Weights are stored transposed relative to PyTorch ((in, out)), zero-padded
    to the kernel's aligned shapes, and cast to bf16. Biases stay f32."""
    ks = jax.random.split(key, 6)

    def linear(kw, kb, fan_in, fan_out, pad_in=None, pad_out=None):
        bound = 1.0 / jnp.sqrt(jnp.float32(fan_in))
        w = jax.random.uniform(kw, (fan_in, fan_out), jnp.float32, -bound, bound)
        b = jax.random.uniform(kb, (1, fan_out), jnp.float32, -bound, bound)
        if pad_in is not None:
            w = jnp.pad(w, ((0, pad_in - fan_in), (0, 0)))
        if pad_out is not None:
            w = jnp.pad(w, ((0, 0), (0, pad_out - fan_out)))
            b = jnp.pad(b, ((0, 0), (0, pad_out - fan_out)))
        return w.astype(jnp.bfloat16), b

    w1, b1 = linear(ks[0], ks[1], IN_DIM, H1, pad_in=IN_PAD)
    w2, b2 = linear(ks[2], ks[3], H1, H2)
    w3, b3 = linear(ks[4], ks[5], H2, OUT_DIM, pad_out=OUT_PAD)
    return (w1, b1, w2, b2, w3, b3)


if __name__ == "__main__":
    key = jax.random.PRNGKey(0)
    k_param, k_x = jax.random.split(key)

    params = init_params(k_param)
    # Matches the PyTorch forward's implied input: (B, 10, 14, 2) -> view(-1, 280)
    x = jax.random.normal(k_x, (8, 10, 14, 2), dtype=jnp.float32)

    out = mlp_forward(x, params)
    out = jax.block_until_ready(out)

    # Reference in plain JAX with the SAME bf16 params / padding (so the only
    # deltas are accumulation order inside the MXU).
    w1, b1, w2, b2, w3, b3 = params
    x_pad = jnp.pad(x.reshape(-1, IN_DIM), ((0, 0), (0, IN_PAD - IN_DIM))).astype(jnp.bfloat16)
    r1 = jnp.maximum(jnp.dot(x_pad, w1, preferred_element_type=jnp.float32) + b1, 0.0)
    r1 = r1.astype(jnp.bfloat16)
    r2 = jnp.maximum(jnp.dot(r1, w2, preferred_element_type=jnp.float32) + b2, 0.0)
    r2 = r2.astype(jnp.bfloat16)
    ref = (jnp.dot(r2, w3, preferred_element_type=jnp.float32) + b3)[:, :OUT_DIM]

    assert out.shape == (8, OUT_DIM)
    assert jnp.allclose(out, ref, atol=2e-2, rtol=2e-2), float(jnp.max(jnp.abs(out - ref)))

    print("KERNEL_OK")
</pallas_src>

<mosaic_0001>
module attributes {stable_mosaic.version = 11 : i64} {
  func.func @mlp_kernel(%arg0: i32, %arg1: memref<8x384xbf16, #tpu.memory_space<vmem>>, %arg2: memref<384x256xbf16, #tpu.memory_space<vmem>>, %arg3: memref<1x256xf32, #tpu.memory_space<vmem>>, %arg4: memref<256x128xbf16, #tpu.memory_space<vmem>>, %arg5: memref<1x128xf32, #tpu.memory_space<vmem>>, %arg6: memref<128x128xbf16, #tpu.memory_space<vmem>>, %arg7: memref<1x128xf32, #tpu.memory_space<vmem>>, %arg8: memref<8x128xf32, #tpu.memory_space<vmem>>) attributes {dimension_semantics = [#tpu.dimension_semantics<parallel>], iteration_bounds = array<i64: 1>, scalar_prefetch = 0 : i64, scratch_operands = 0 : i64, tpu.core_type = #tpu.core_type<tc>, window_params = [{transform_indices = @transform_0, window_bounds = array<i64: 8, 384>}, {pipeline_mode = #tpu.pipeline_mode<synchronous>, transform_indices = @transform_1, window_bounds = array<i64: 384, 256>}, {pipeline_mode = #tpu.pipeline_mode<synchronous>, transform_indices = @transform_2, window_bounds = array<i64: 1, 256>}, {pipeline_mode = #tpu.pipeline_mode<synchronous>, transform_indices = @transform_3, window_bounds = array<i64: 256, 128>}, {pipeline_mode = #tpu.pipeline_mode<synchronous>, transform_indices = @transform_4, window_bounds = array<i64: 1, 128>}, {pipeline_mode = #tpu.pipeline_mode<synchronous>, transform_indices = @transform_5, window_bounds = array<i64: 128, 128>}, {pipeline_mode = #tpu.pipeline_mode<synchronous>, transform_indices = @transform_6, window_bounds = array<i64: 1, 128>}, {transform_indices = @transform_7, window_bounds = array<i64: 8, 128>}]} {
    %c0 = arith.constant 0 : index
    %c0_0 = arith.constant 0 : index
    %0 = vector.load %arg1[%c0, %c0_0] : memref<8x384xbf16, #tpu.memory_space<vmem>>, vector<8x384xbf16>
    %c0_1 = arith.constant 0 : index
    %c0_2 = arith.constant 0 : index
    %1 = vector.load %arg2[%c0_1, %c0_2] : memref<384x256xbf16, #tpu.memory_space<vmem>>, vector<384x256xbf16>
    %cst = arith.constant dense<0.000000e+00> : vector<8x256xf32>
    %2 = tpu.matmul %0, %1, %cst {dimension_numbers = #tpu.dot_dimension_numbers<[1], [0], [0], [1], [0, 0, 1, 1], [], []>} : vector<8x384xbf16>, vector<384x256xbf16>, vector<8x256xf32> -> vector<8x256xf32>
    %c0_3 = arith.constant 0 : index
    %c0_4 = arith.constant 0 : index
    %3 = vector.load %arg3[%c0_3, %c0_4] : memref<1x256xf32, #tpu.memory_space<vmem>>, vector<1x256xf32>
    %4 = vector.broadcast %3 : vector<1x256xf32> to vector<8x256xf32>
    %5 = arith.addf %2, %4 : vector<8x256xf32>
    %cst_5 = arith.constant 0.000000e+00 : f32
    %6 = vector.broadcast %cst_5 : f32 to vector<8x256xf32>
    %7 = arith.maximumf %5, %6 : vector<8x256xf32>
    %8 = arith.truncf %7 : vector<8x256xf32> to vector<8x256xbf16>
    %c0_6 = arith.constant 0 : index
    %c0_7 = arith.constant 0 : index
    %9 = vector.load %arg4[%c0_6, %c0_7] : memref<256x128xbf16, #tpu.memory_space<vmem>>, vector<256x128xbf16>
    %cst_8 = arith.constant dense<0.000000e+00> : vector<8x128xf32>
    %10 = tpu.matmul %8, %9, %cst_8 {dimension_numbers = #tpu.dot_dimension_numbers<[1], [0], [0], [1], [0, 0, 1, 1], [], []>} : vector<8x256xbf16>, vector<256x128xbf16>, vector<8x128xf32> -> vector<8x128xf32>
    %c0_9 = arith.constant 0 : index
    %c0_10 = arith.constant 0 : index
    %11 = vector.load %arg5[%c0_9, %c0_10] : memref<1x128xf32, #tpu.memory_space<vmem>>, vector<1x128xf32>
    %12 = vector.broadcast %11 : vector<1x128xf32> to vector<8x128xf32>
    %13 = arith.addf %10, %12 : vector<8x128xf32>
    %cst_11 = arith.constant 0.000000e+00 : f32
    %14 = vector.broadcast %cst_11 : f32 to vector<8x128xf32>
    %15 = arith.maximumf %13, %14 : vector<8x128xf32>
    %16 = arith.truncf %15 : vector<8x128xf32> to vector<8x128xbf16>
    %c0_12 = arith.constant 0 : index
    %c0_13 = arith.constant 0 : index
    %17 = vector.load %arg6[%c0_12, %c0_13] : memref<128x128xbf16, #tpu.memory_space<vmem>>, vector<128x128xbf16>
    %cst_14 = arith.constant dense<0.000000e+00> : vector<8x128xf32>
    %18 = tpu.matmul %16, %17, %cst_14 {dimension_numbers = #tpu.dot_dimension_numbers<[1], [0], [0], [1], [0, 0, 1, 1], [], []>} : vector<8x128xbf16>, vector<128x128xbf16>, vector<8x128xf32> -> vector<8x128xf32>
    %c0_15 = arith.constant 0 : index
    %c0_16 = arith.constant 0 : index
    %19 = vector.load %arg7[%c0_15, %c0_16] : memref<1x128xf32, #tpu.memory_space<vmem>>, vector<1x128xf32>
    %20 = vector.broadcast %19 : vector<1x128xf32> to vector<8x128xf32>
    %21 = arith.addf %18, %20 : vector<8x128xf32>
    %c0_17 = arith.constant 0 : index
    %c0_18 = arith.constant 0 : index
    %22 = vector.load %arg8[%c0_17, %c0_18] : memref<8x128xf32, #tpu.memory_space<vmem>>, vector<8x128xf32>
    tpu.vector_store %arg8[%c0_17, %c0_18], %21 {strides = array<i32>} : memref<8x128xf32, #tpu.memory_space<vmem>>, vector<8x128xf32>,
    return
  }
  func.func @transform_0(%arg0: i32) -> (i32, i32) {
    %c0_i32 = arith.constant 0 : i32
    %c0_i32_0 = arith.constant 0 : i32
    return %arg0, %c0_i32 : i32, i32
  }
  func.func @transform_1(%arg0: i32) -> (i32, i32) {
    %c0_i32 = arith.constant 0 : i32
    %c0_i32_0 = arith.constant 0 : i32
    %c0_i32_1 = arith.constant 0 : i32
    return %c0_i32, %c0_i32_0 : i32, i32
  }
  func.func @transform_2(%arg0: i32) -> (i32, i32) {
    %c0_i32 = arith.constant 0 : i32
    %c0_i32_0 = arith.constant 0 : i32
    %c0_i32_1 = arith.constant 0 : i32
    return %c0_i32, %c0_i32_0 : i32, i32
  }
  func.func @transform_3(%arg0: i32) -> (i32, i32) {
    %c0_i32 = arith.constant 0 : i32
    %c0_i32_0 = arith.constant 0 : i32
    %c0_i32_1 = arith.constant 0 : i32
    return %c0_i32, %c0_i32_0 : i32, i32
  }
  func.func @transform_4(%arg0: i32) -> (i32, i32) {
    %c0_i32 = arith.constant 0 : i32
    %c0_i32_0 = arith.constant 0 : i32
    %c0_i32_1 = arith.constant 0 : i32
    return %c0_i32, %c0_i32_0 : i32, i32
  }
  func.func @transform_5(%arg0: i32) -> (i32, i32) {
    %c0_i32 = arith.constant 0 : i32
    %c0_i32_0 = arith.constant 0 : i32
    %c0_i32_1 = arith.constant 0 : i32
    return %c0_i32, %c0_i32_0 : i32, i32
  }
  func.func @transform_6(%arg0: i32) -> (i32, i32) {
    %c0_i32 = arith.constant 0 : i32
    %c0_i32_0 = arith.constant 0 : i32
    %c0_i32_1 = arith.constant 0 : i32
    return %c0_i32, %c0_i32_0 : i32, i32
  }
  func.func @transform_7(%arg0: i32) -> (i32, i32) {
    %c0_i32 = arith.constant 0 : i32
    %c0_i32_0 = arith.constant 0 : i32
    return %arg0, %c0_i32 : i32, i32
  }
}

</mosaic_0001>

<llo_original>
// kernel: tpu_custom_call.1
$region0: #{tpu_custom_call.1}
  #allocation0 [shape = 'u32[]', space=smem, size = 0x4, offset = 0x4, fixed_abs, tag = 'smem constant byte address 0x4 - core index']
  #allocation1 [shape = 'u32[144,128]{1,0:T(1,128)}', space=vmem, size = 0x12000, scoped, tag = 'internal scratch']
  %s0 = inlined_call_operand.hbm [shape: bf16[8,384], index: 0, kind: input, shape index: {}]
  %s1 = inlined_call_operand.hbm [shape: bf16[384,256], index: 1, kind: input, shape index: {}]
  %s2 = inlined_call_operand.vmem [shape: f32[1,256], index: 2, kind: input, shape index: {}]
  %s3 = inlined_call_operand.hbm [shape: bf16[256,128], index: 3, kind: input, shape index: {}]
  %s4 = inlined_call_operand.vmem [shape: f32[1,128], index: 4, kind: input, shape index: {}]
  %s5 = inlined_call_operand.hbm [shape: bf16[128,128], index: 5, kind: input, shape index: {}]
  %s6 = inlined_call_operand.vmem [shape: f32[1,128], index: 6, kind: input, shape index: {}]
  %s7 = inlined_call_operand.hbm [shape: f32[8,128], index: 7, kind: output, shape index: {}]
  %s8 = sld [smem:[#allocation0]]
  $region54: #{tpu_custom_call.1} parent=0
    _
  %s10 = ssub.s32 1, %s8
  %s11 = scalar_select 0, %s10, %s8
  $region1: #{tpu_custom_call.1} parent=0
    #allocation2 [shape = 'u8[6144]{0}', space=vmem, size = 0x1800, scoped, tag = 'input window, operand 0, single buffered']
    #allocation3 [shape = 's32[1]{0}', space=sflag, size = 0x4, scoped, tag = 'scoped memory for tpu_custom_call.1']
    #allocation4 [shape = 's32[1]{0}', space=sflag, size = 0x4, scoped, tag = 'scoped memory for tpu_custom_call.1']
    #allocation5 [shape = 'u8[196608]{0}', space=vmem, size = 0x30000, scoped, tag = 'input window, operand 1, single buffered']
    #allocation6 [shape = 's32[1]{0}', space=sflag, size = 0x4, scoped, tag = 'scoped memory for tpu_custom_call.1']
    #allocation7 [shape = 'u8[65536]{0}', space=vmem, size = 0x10000, scoped, tag = 'input window, operand 3, single buffered']
    #allocation8 [shape = 'u8[32768]{0}', space=vmem, size = 0x8000, scoped, tag = 'input window, operand 5, single buffered']
    #allocation9 [shape = 's32[1]{0}', space=sflag, size = 0x4, scoped, tag = 'scoped memory for tpu_custom_call.1']
    #allocation10 [shape = 'u8[4096]{0}', space=vmem, size = 0x1000, scoped, tag = 'output window, operand 0, single buffered']
    %12 = vsyncpa [#allocation3], 0
    %13 = vsyncpa [#allocation6], 0
    %14 = vsyncpa [#allocation9], 0
    %15 = vsyncpa [#allocation4], 0
    // Predicated region
    $region2: #{tpu_custom_call.1} parent=1 // pred_check
      _
    $region3: #{tpu_custom_call.1} parent=1 // pred_check_branch
      %17 = sbr.rel (0) target = $region5
    $region4: #{tpu_custom_call.1} parent=1 // pred_region
      %s19 = ssub.s32 192, 192
      %20 = vsyncadd [#allocation3], %s19
      %s22 = sshll.u32 [#allocation2], 4
      %s23 = int_to_ptr.vmem [resolvable:$true] %s22
      %25 = dma.hbm_to_vmem [thread:$0]  %s0, 192, %s23, [#allocation3]
    $region5: #{tpu_custom_call.1} parent=1 // pred_fallthru
      _
    // Predicated region
    $region6: #{tpu_custom_call.1} parent=1 // pred_check
      _
    $region7: #{tpu_custom_call.1} parent=1 // pred_check_branch
      %27 = sbr.rel (0) target = $region9
    $region8: #{tpu_custom_call.1} parent=1 // pred_region
      %s29 = ssub.s32 6144, 6144
      %30 = vsyncadd [#allocation6], %s29
      %s31 = sshll.u32 [#allocation5], 4
      %s32 = int_to_ptr.vmem [resolvable:$true] %s31
      %37 = dma.hbm_to_vmem [thread:$0]  %s1, 6144, %s32, [#allocation6], 128, 128, 8
    $region9: #{tpu_custom_call.1} parent=1 // pred_fallthru
      _
    // Predicated region
    $region10: #{tpu_custom_call.1} parent=1 // pred_check
      _
    $region11: #{tpu_custom_call.1} parent=1 // pred_check_branch
      %39 = sbr.rel (0) target = $region13
    $region12: #{tpu_custom_call.1} parent=1 // pred_region
      _
    $region13: #{tpu_custom_call.1} parent=1 // pred_fallthru
      _
    // Predicated region
    $region14: #{tpu_custom_call.1} parent=1 // pred_check
      _
    $region15: #{tpu_custom_call.1} parent=1 // pred_check_branch
      %41 = sbr.rel (0) target = $region17
    $region16: #{tpu_custom_call.1} parent=1 // pred_region
      %s43 = ssub.s32 2048, 2048
      %44 = vsyncadd [#allocation6], %s43
      %s45 = sshll.u32 [#allocation7], 4
      %s46 = int_to_ptr.vmem [resolvable:$true] %s45
      %51 = dma.hbm_to_vmem [thread:$0]  %s3, 2048, %s46, [#allocation6], 64, 64, 4
    $region17: #{tpu_custom_call.1} parent=1 // pred_fallthru
      _
    // Predicated region
    $region18: #{tpu_custom_call.1} parent=1 // pred_check
      _
    $region19: #{tpu_custom_call.1} parent=1 // pred_check_branch
      %53 = sbr.rel (0) target = $region21
    $region20: #{tpu_custom_call.1} parent=1 // pred_region
      _
    $region21: #{tpu_custom_call.1} parent=1 // pred_fallthru
      _
    // Predicated region
    $region22: #{tpu_custom_call.1} parent=1 // pred_check
      _
    $region23: #{tpu_custom_call.1} parent=1 // pred_check_branch
      %55 = sbr.rel (0) target = $region25
    $region24: #{tpu_custom_call.1} parent=1 // pred_region
      %s57 = ssub.s32 1024, 1024
      %58 = vsyncadd [#allocation9], %s57
      %s59 = sshll.u32 [#allocation8], 4
      %s60 = int_to_ptr.vmem [resolvable:$true] %s59
      %65 = dma.hbm_to_vmem [thread:$0]  %s5, 1024, %s60, [#allocation9], 64, 64, 4
    $region25: #{tpu_custom_call.1} parent=1 // pred_fallthru
      _
    // Predicated region
    $region26: #{tpu_custom_call.1} parent=1 // pred_check
      _
    $region27: #{tpu_custom_call.1} parent=1 // pred_check_branch
      %67 = sbr.rel (0) target = $region29
    $region28: #{tpu_custom_call.1} parent=1 // pred_region
      _
    $region29: #{tpu_custom_call.1} parent=1 // pred_fallthru
      _
    // Predicated region
    $region30: #{tpu_custom_call.1} parent=1 // pred_check
      _
    $region31: #{tpu_custom_call.1} parent=1 // pred_check_branch
      %69 = sbr.rel (0) target = $region33
    $region32: #{tpu_custom_call.1} parent=1 // pred_region
      %70 = dma.done [#allocation3], 192
    $region33: #{tpu_custom_call.1} parent=1 // pred_fallthru
      _
    // Predicated region
    $region34: #{tpu_custom_call.1} parent=1 // pred_check
      _
    $region35: #{tpu_custom_call.1} parent=1 // pred_check_branch
      %72 = sbr.rel (0) target = $region37
    $region36: #{tpu_custom_call.1} parent=1 // pred_region
      %73 = dma.done [#allocation6], 6144
    $region37: #{tpu_custom_call.1} parent=1 // pred_fallthru
      _
    // Predicated region
    $region38: #{tpu_custom_call.1} parent=1 // pred_check
      _
    $region39: #{tpu_custom_call.1} parent=1 // pred_check_branch
      %75 = sbr.rel (0) target = $region41
    $region40: #{tpu_custom_call.1} parent=1 // pred_region
      %76 = dma.done [#allocation6], 2048
    $region41: #{tpu_custom_call.1} parent=1 // pred_fallthru
      _
    // Predicated region
    $region42: #{tpu_custom_call.1} parent=1 // pred_check
      _
    $region43: #{tpu_custom_call.1} parent=1 // pred_check_branch
      %78 = sbr.rel (0) target = $region45
    $region44: #{tpu_custom_call.1} parent=1 // pred_region
      %79 = dma.done [#allocation9], 1024
    $region45: #{tpu_custom_call.1} parent=1 // pred_fallthru
      _
    %v81 = vld [vmem:[#allocation2] sm:$0xff]
    %v82 = vld [vmem:[#allocation2 + $0x8] sm:$0xf]
    %v83 = vld [vmem:[#allocation5] sm:$0xff]
    %v84 = vld [vmem:[#allocation5 + $0x8] sm:$0xff]
    %v85 = vld [vmem:[#allocation5 + $0x10] sm:$0xff]
    %v86 = vld [vmem:[#allocation5 + $0x18] sm:$0xff]
    %v87 = vld [vmem:[#allocation5 + $0x20] sm:$0xff]
    %v88 = vld [vmem:[#allocation5 + $0x28] sm:$0xff]
    %v89 = vld [vmem:[#allocation5 + $0x30] sm:$0xff]
    %v90 = vld [vmem:[#allocation5 + $0x38] sm:$0xff]
    %v91 = vld [vmem:[#allocation5 + $0x40] sm:$0xff]
    %v92 = vld [vmem:[#allocation5 + $0x48] sm:$0xff]
    %v93 = vld [vmem:[#allocation5 + $0x50] sm:$0xff]
    %v94 = vld [vmem:[#allocation5 + $0x58] sm:$0xff]
    %v95 = vld [vmem:[#allocation5 + $0x60] sm:$0xff]
    %v96 = vld [vmem:[#allocation5 + $0x68] sm:$0xff]
    %v97 = vld [vmem:[#allocation5 + $0x70] sm:$0xff]
    %v98 = vld [vmem:[#allocation5 + $0x78] sm:$0xff]
    %v99 = vld [vmem:[#allocation5 + $0x80] sm:$0xff]
    %v100 = vld [vmem:[#allocation5 + $0x88] sm:$0xff]
    %v101 = vld [vmem:[#allocation5 + $0x90] sm:$0xff]
    %v102 = vld [vmem:[#allocation5 + $0x98] sm:$0xff]
    %v103 = vld [vmem:[#allocation5 + $0xa0] sm:$0xff]
    %v104 = vld [vmem:[#allocation5 + $0xa8] sm:$0xff]
    %v105 = vld [vmem:[#allocation5 + $0xb0] sm:$0xff]
    %v106 = vld [vmem:[#allocation5 + $0xb8] sm:$0xff]
    %v107 = vld [vmem:[#allocation5 + $0xc0] sm:$0xff]
    %v108 = vld [vmem:[#allocation5 + $0xc8] sm:$0xff]
    %v109 = vld [vmem:[#allocation5 + $0xd0] sm:$0xff]
    %v110 = vld [vmem:[#allocation5 + $0xd8] sm:$0xff]
    %v111 = vld [vmem:[#allocation5 + $0xe0] sm:$0xff]
    %v112 = vld [vmem:[#allocation5 + $0xe8] sm:$0xff]
    %v113 = vld [vmem:[#allocation5 + $0xf0] sm:$0xff]
    %v114 = vld [vmem:[#allocation5 + $0xf8] sm:$0xff]
    %v115 = vld [vmem:[#allocation5 + $0x100] sm:$0xff]
    %v116 = vld [vmem:[#allocation5 + $0x108] sm:$0xff]
    %v117 = vld [vmem:[#allocation5 + $0x110] sm:$0xff]
    %v118 = vld [vmem:[#allocation5 + $0x118] sm:$0xff]
    %v119 = vld [vmem:[#allocation5 + $0x120] sm:$0xff]
    %v120 = vld [vmem:[#allocation5 + $0x128] sm:$0xff]
    %v121 = vld [vmem:[#allocation5 + $0x130] sm:$0xff]
    %v122 = vld [vmem:[#allocation5 + $0x138] sm:$0xff]
    %v123 = vld [vmem:[#allocation5 + $0x140] sm:$0xff]
    %v124 = vld [vmem:[#allocation5 + $0x148] sm:$0xff]
    %v125 = vld [vmem:[#allocation5 + $0x150] sm:$0xff]
    %v126 = vld [vmem:[#allocation5 + $0x158] sm:$0xff]
    %v127 = vld [vmem:[#allocation5 + $0x160] sm:$0xff]
    %v128 = vld [vmem:[#allocation5 + $0x168] sm:$0xff]
    %v129 = vld [vmem:[#allocation5 + $0x170] sm:$0xff]
    %v130 = vld [vmem:[#allocation5 + $0x178] sm:$0xff]
    %v131 = vld [vmem:[%s2] sm:$0x3]
    %v133 = vlaneseq
    %v134 = vshrl.u32 %v133, 7
    %v135 = vsub.s32 0, %v134
    %v136 = vrot.slane %v131, %v135
    %v137 = vlaneseq
    %v138 = vshrl.u32 %v137, 7
    %v139 = vsub.s32 1, %v138
    %v140 = vrot.slane %v131, %v139
    %v145 = vunpack.c.l.b16 %v81
    %v146 = vunpack.c.h.b16 %v81
    %v147 = vunpack.c.l.b16 %v82
    %v148 = vpack.c.b16 %v145, %v145
    %v149 = vpack.c.b16 %v146, %v146
    %v150 = vpack.c.b16 %v147, %v147
    %v202 = vunpack.c.l.b16 %v83
    %v203 = vunpack.c.h.b16 %v83
    %v204 = vunpack.c.l.b16 %v84
    %v205 = vunpack.c.h.b16 %v84
    %v206 = vunpack.c.l.b16 %v85
    %v207 = vunpack.c.h.b16 %v85
    %v208 = vunpack.c.l.b16 %v86
    %v209 = vunpack.c.h.b16 %v86
    %v210 = vunpack.c.l.b16 %v87
    %v211 = vunpack.c.h.b16 %v87
    %v212 = vunpack.c.l.b16 %v88
    %v213 = vunpack.c.h.b16 %v88
    %v214 = vunpack.c.l.b16 %v89
    %v215 = vunpack.c.h.b16 %v89
    %v216 = vunpack.c.l.b16 %v90
    %v217 = vunpack.c.h.b16 %v90
    %v218 = vunpack.c.l.b16 %v91
    %v219 = vunpack.c.h.b16 %v91
    %v220 = vunpack.c.l.b16 %v92
    %v221 = vunpack.c.h.b16 %v92
    %v222 = vunpack.c.l.b16 %v93
    %v223 = vunpack.c.h.b16 %v93
    %v224 = vunpack.c.l.b16 %v94
    %v225 = vunpack.c.h.b16 %v94
    %v226 = vunpack.c.l.b16 %v95
    %v227 = vunpack.c.h.b16 %v95
    %v228 = vunpack.c.l.b16 %v96
    %v229 = vunpack.c.h.b16 %v96
    %v230 = vunpack.c.l.b16 %v97
    %v231 = vunpack.c.h.b16 %v97
    %v232 = vunpack.c.l.b16 %v98
    %v233 = vunpack.c.h.b16 %v98
    %v234 = vunpack.c.l.b16 %v99
    %v235 = vunpack.c.h.b16 %v99
    %v236 = vunpack.c.l.b16 %v100
    %v237 = vunpack.c.h.b16 %v100
    %v238 = vunpack.c.l.b16 %v101
    %v239 = vunpack.c.h.b16 %v101
    %v240 = vunpack.c.l.b16 %v102
    %v241 = vunpack.c.h.b16 %v102
    %v242 = vunpack.c.l.b16 %v103
    %v243 = vunpack.c.h.b16 %v103
    %v244 = vunpack.c.l.b16 %v104
    %v245 = vunpack.c.h.b16 %v104
    %v246 = vunpack.c.l.b16 %v105
    %v247 = vunpack.c.h.b16 %v105
    %v248 = vunpack.c.l.b16 %v106
    %v249 = vunpack.c.h.b16 %v106
    %v250 = vunpack.c.l.b16 %v107
    %v251 = vunpack.c.h.b16 %v107
    %v252 = vunpack.c.l.b16 %v108
    %v253 = vunpack.c.h.b16 %v108
    %v254 = vunpack.c.l.b16 %v109
    %v255 = vunpack.c.h.b16 %v109
    %v256 = vunpack.c.l.b16 %v110
    %v257 = vunpack.c.h.b16 %v110
    %v258 = vunpack.c.l.b16 %v111
    %v259 = vunpack.c.h.b16 %v111
    %v260 = vunpack.c.l.b16 %v112
    %v261 = vunpack.c.h.b16 %v112
    %v262 = vunpack.c.l.b16 %v113
    %v263 = vunpack.c.h.b16 %v113
    %v264 = vunpack.c.l.b16 %v114
    %v265 = vunpack.c.h.b16 %v114
    %v266 = vunpack.c.l.b16 %v115
    %v267 = vunpack.c.h.b16 %v115
    %v268 = vunpack.c.l.b16 %v116
    %v269 = vunpack.c.h.b16 %v116
    %v270 = vunpack.c.l.b16 %v117
    %v271 = vunpack.c.h.b16 %v117
    %v272 = vunpack.c.l.b16 %v118
    %v273 = vunpack.c.h.b16 %v118
    %v274 = vunpack.c.l.b16 %v119
    %v275 = vunpack.c.h.b16 %v119
    %v276 = vunpack.c.l.b16 %v120
    %v277 = vunpack.c.h.b16 %v120
    %v278 = vunpack.c.l.b16 %v121
    %v279 = vunpack.c.h.b16 %v121
    %v280 = vunpack.c.l.b16 %v122
    %v281 = vunpack.c.h.b16 %v122
    %v282 = vunpack.c.l.b16 %v123
    %v283 = vunpack.c.h.b16 %v123
    %v284 = vunpack.c.l.b16 %v124
    %v285 = vunpack.c.h.b16 %v124
    %v286 = vunpack.c.l.b16 %v125
    %v287 = vunpack.c.h.b16 %v125
    %v288 = vunpack.c.l.b16 %v126
    %v289 = vunpack.c.h.b16 %v126
    %v290 = vunpack.c.l.b16 %v127
    %v291 = vunpack.c.h.b16 %v127
    %v292 = vunpack.c.l.b16 %v128
    %v293 = vunpack.c.h.b16 %v128
    %v294 = vunpack.c.l.b16 %v129
    %v295 = vunpack.c.h.b16 %v129
    %v296 = vunpack.c.l.b16 %v130
    %v297 = vunpack.c.h.b16 %v130
    %v298 = vpack.c.b16 %v204, %v202
    %v299 = vpack.c.b16 %v205, %v203
    %v300 = vpack.c.b16 %v208, %v206
    %v301 = vpack.c.b16 %v209, %v207
    %v302 = vpack.c.b16 %v212, %v210
    %v303 = vpack.c.b16 %v213, %v211
    %v304 = vpack.c.b16 %v216, %v214
    %v305 = vpack.c.b16 %v217, %v215
    %v306 = vpack.c.b16 %v220, %v218
    %v307 = vpack.c.b16 %v221, %v219
    %v308 = vpack.c.b16 %v224, %v222
    %v309 = vpack.c.b16 %v225, %v223
    %v310 = vpack.c.b16 %v228, %v226
    %v311 = vpack.c.b16 %v229, %v227
    %v312 = vpack.c.b16 %v232, %v230
    %v313 = vpack.c.b16 %v233, %v231
    %v314 = vpack.c.b16 %v236, %v234
    %v315 = vpack.c.b16 %v237, %v235
    %v316 = vpack.c.b16 %v240, %v238
    %v317 = vpack.c.b16 %v241, %v239
    %v318 = vpack.c.b16 %v244, %v242
    %v319 = vpack.c.b16 %v245, %v243
    %v320 = vpack.c.b16 %v248, %v246
    %v321 = vpack.c.b16 %v249, %v247
    %v322 = vpack.c.b16 %v252, %v250
    %v323 = vpack.c.b16 %v253, %v251
    %v324 = vpack.c.b16 %v256, %v254
    %v325 = vpack.c.b16 %v257, %v255
    %v326 = vpack.c.b16 %v260, %v258
    %v327 = vpack.c.b16 %v261, %v259
    %v328 = vpack.c.b16 %v264, %v262
    %v329 = vpack.c.b16 %v265, %v263
    %v330 = vpack.c.b16 %v268, %v266
    %v331 = vpack.c.b16 %v269, %v267
    %v332 = vpack.c.b16 %v272, %v270
    %v333 = vpack.c.b16 %v273, %v271
    %v334 = vpack.c.b16 %v276, %v274
    %v335 = vpack.c.b16 %v277, %v275
    %v336 = vpack.c.b16 %v280, %v278
    %v337 = vpack.c.b16 %v281, %v279
    %v338 = vpack.c.b16 %v284, %v282
    %v339 = vpack.c.b16 %v285, %v283
    %v340 = vpack.c.b16 %v288, %v286
    %v341 = vpack.c.b16 %v289, %v287
    %v342 = vpack.c.b16 %v292, %v290
    %v343 = vpack.c.b16 %v293, %v291
    %v344 = vpack.c.b16 %v296, %v294
    %v345 = vpack.c.b16 %v297, %v295
    %394 = vmatprep.subr.bf16.mxu0 %v313
    %395 = vmatpush1.bf16.msra.mxu0 %v312
    %396 = vmatprep.subr.bf16.mxu0 %v311
    %397 = vmatpush1.bf16.msra.mxu0 %v310
    %398 = vmatprep.subr.bf16.mxu0 %v309
    %399 = vmatpush1.bf16.msra.mxu0 %v308
    %400 = vmatprep.subr.bf16.mxu0 %v307
    %401 = vmatpush1.bf16.msra.mxu0 %v306
    %402 = vmatprep.subr.bf16.mxu0 %v305
    %403 = vmatpush1.bf16.msra.mxu0 %v304
    %404 = vmatprep.subr.bf16.mxu0 %v303
    %405 = vmatpush1.bf16.msra.mxu0 %v302
    %406 = vmatprep.subr.bf16.mxu0 %v301
    %407 = vmatpush1.bf16.msra.mxu0 %v300
    %408 = vmatprep.subr.bf16.mxu0 %v299
    %409 = vmatpush1.bf16.msra.mxu0 %v298
    %410 = vmatprep.subr.bf16.mxu0 %v329
    %411 = vmatpush2.bf16.msra.mxu0 %v328
    %412 = vmatprep.subr.bf16.mxu0 %v327
    %413 = vmatpush2.bf16.msra.mxu0 %v326
    %414 = vmatprep.subr.bf16.mxu0 %v325
    %415 = vmatpush2.bf16.msra.mxu0 %v324
    %416 = vmatprep.subr.bf16.mxu0 %v323
    %417 = vmatpush2.bf16.msra.mxu0 %v322
    %418 = vmatprep.subr.bf16.mxu0 %v321
    %419 = vmatpush2.bf16.msra.mxu0 %v320
    %420 = vmatprep.subr.bf16.mxu0 %v319
    %421 = vmatpush2.bf16.msra.mxu0 %v318
    %422 = vmatprep.subr.bf16.mxu0 %v317
    %423 = vmatpush2.bf16.msra.mxu0 %v316
    %424 = vmatprep.subr.bf16.mxu0 %v315
    %425 = vmatpush2.bf16.msra.mxu0 %v314
    %426 = vmatprep.mubr.bf16.mxu0 %v149
    %427 = vmatmul.mubr.bf16.gmra.mxu0 %v148
    %v428 = vpop.f32.mrf.mxu0
    %v429 = vadd.f32 %v136, %v428
    %v430 = vpop.f32.mrf.mxu0
    %v431 = vadd.f32 %v140, %v430
    %v432 = vpop.f32.mrf.mxu0
    %v433 = vpop.f32.mrf.mxu0
    %434 = vdwg.mxu0
    %435 = vmatprep.subr.bf16.mxu0 %v345
    %436 = vmatpush1.bf16.msra.mxu0 %v344
    %437 = vmatprep.subr.bf16.mxu0 %v343
    %438 = vmatpush1.bf16.msra.mxu0 %v342
    %439 = vmatprep.subr.bf16.mxu0 %v341
    %440 = vmatpush1.bf16.msra.mxu0 %v340
    %441 = vmatprep.subr.bf16.mxu0 %v339
    %442 = vmatpush1.bf16.msra.mxu0 %v338
    %443 = vmatprep.subr.bf16.mxu0 %v337
    %444 = vmatpush1.bf16.msra.mxu0 %v336
    %445 = vmatprep.subr.bf16.mxu0 %v335
    %446 = vmatpush1.bf16.msra.mxu0 %v334
    %447 = vmatprep.subr.bf16.mxu0 %v333
    %448 = vmatpush1.bf16.msra.mxu0 %v332
    %449 = vmatprep.subr.bf16.mxu0 %v331
    %450 = vmatpush1.bf16.msra.mxu0 %v330
    %451 = vmatprep.subr.bf16.mxu0 0
    %452 = vmatpush2.bf16.msra.mxu0 0
    %453 = vmatprep.subr.bf16.mxu0 0
    %454 = vmatpush2.bf16.msra.mxu0 0
    %455 = vmatprep.subr.bf16.mxu0 0
    %456 = vmatpush2.bf16.msra.mxu0 0
    %457 = vmatprep.subr.bf16.mxu0 0
    %458 = vmatpush2.bf16.msra.mxu0 0
    %459 = vmatprep.subr.bf16.mxu0 0
    %460 = vmatpush2.bf16.msra.mxu0 0
    %461 = vmatprep.subr.bf16.mxu0 0
    %462 = vmatpush2.bf16.msra.mxu0 0
    %463 = vmatprep.subr.bf16.mxu0 0
    %464 = vmatpush2.bf16.msra.mxu0 0
    %465 = vmatprep.subr.bf16.mxu0 0
    %466 = vmatpush2.bf16.msra.mxu0 0
    %467 = vmatprep.mubr.bf16.mxu0 0
    %468 = vmatmul.mubr.bf16.gmra.mxu0 %v150
    %v469 = vpop.f32.mrf.mxu0
    %v470 = vadd.f32 %v429, %v469
    %v471 = vpop.f32.mrf.mxu0
    %v472 = vadd.f32 %v431, %v471
    %v473 = vpop.f32.mrf.mxu0
    %v474 = vpop.f32.mrf.mxu0
    %475 = vdwg.mxu0
    %v476 = vmax.f32 %v470, 0.0
    %v477 = vmax.f32 %v472, 0.0
    %v478 = vpack.c.bf16 %v476, %v476
    %v479 = vpack.c.bf16 %v477, %v477
    %v480 = vld [vmem:[#allocation7] sm:$0xf]
    %v481 = vld [vmem:[#allocation7 + $0x4] sm:$0xf]
    %v482 = vld [vmem:[#allocation7 + $0x8] sm:$0xf]
    %v483 = vld [vmem:[#allocation7 + $0xc] sm:$0xf]
    %v484 = vld [vmem:[#allocation7 + $0x10] sm:$0xf]
    %v485 = vld [vmem:[#allocation7 + $0x14] sm:$0xf]
    %v486 = vld [vmem:[#allocation7 + $0x18] sm:$0xf]
    %v487 = vld [vmem:[#allocation7 + $0x1c] sm:$0xf]
    %v488 = vld [vmem:[#allocation7 + $0x20] sm:$0xf]
    %v489 = vld [vmem:[#allocation7 + $0x24] sm:$0xf]
    %v490 = vld [vmem:[#allocation7 + $0x28] sm:$0xf]
    %v491 = vld [vmem:[#allocation7 + $0x2c] sm:$0xf]
    %v492 = vld [vmem:[#allocation7 + $0x30] sm:$0xf]
    %v493 = vld [vmem:[#allocation7 + $0x34] sm:$0xf]
    %v494 = vld [vmem:[#allocation7 + $0x38] sm:$0xf]
    %v495 = vld [vmem:[#allocation7 + $0x3c] sm:$0xf]
    %v496 = vld [vmem:[#allocation7 + $0x40] sm:$0xf]
    %v497 = vld [vmem:[#allocation7 + $0x44] sm:$0xf]
    %v498 = vld [vmem:[#allocation7 + $0x48] sm:$0xf]
    %v499 = vld [vmem:[#allocation7 + $0x4c] sm:$0xf]
    %v500 = vld [vmem:[#allocation7 + $0x50] sm:$0xf]
    %v501 = vld [vmem:[#allocation7 + $0x54] sm:$0xf]
    %v502 = vld [vmem:[#allocation7 + $0x58] sm:$0xf]
    %v503 = vld [vmem:[#allocation7 + $0x5c] sm:$0xf]
    %v504 = vld [vmem:[#allocation7 + $0x60] sm:$0xf]
    %v505 = vld [vmem:[#allocation7 + $0x64] sm:$0xf]
    %v506 = vld [vmem:[#allocation7 + $0x68] sm:$0xf]
    %v507 = vld [vmem:[#allocation7 + $0x6c] sm:$0xf]
    %v508 = vld [vmem:[#allocation7 + $0x70] sm:$0xf]
    %v509 = vld [vmem:[#allocation7 + $0x74] sm:$0xf]
    %v510 = vld [vmem:[#allocation7 + $0x78] sm:$0xf]
    %v511 = vld [vmem:[#allocation7 + $0x7c] sm:$0xf]
    %v512 = vld [vmem:[%s4] sm:$0x1]
    %v514 = vlaneseq
    %v515 = vshrl.u32 %v514, 7
    %v516 = vsub.s32 0, %v515
    %v517 = vrot.slane %v512, %v516
    %v551 = vunpack.c.l.b16 %v480
    %v552 = vunpack.c.l.b16 %v481
    %v553 = vunpack.c.l.b16 %v482
    %v554 = vunpack.c.l.b16 %v483
    %v555 = vunpack.c.l.b16 %v484
    %v556 = vunpack.c.l.b16 %v485
    %v557 = vunpack.c.l.b16 %v486
    %v558 = vunpack.c.l.b16 %v487
    %v559 = vunpack.c.l.b16 %v488
    %v560 = vunpack.c.l.b16 %v489
    %v561 = vunpack.c.l.b16 %v490
    %v562 = vunpack.c.l.b16 %v491
    %v563 = vunpack.c.l.b16 %v492
    %v564 = vunpack.c.l.b16 %v493
    %v565 = vunpack.c.l.b16 %v494
    %v566 = vunpack.c.l.b16 %v495
    %v567 = vunpack.c.l.b16 %v496
    %v568 = vunpack.c.l.b16 %v497
    %v569 = vunpack.c.l.b16 %v498
    %v570 = vunpack.c.l.b16 %v499
    %v571 = vunpack.c.l.b16 %v500
    %v572 = vunpack.c.l.b16 %v501
    %v573 = vunpack.c.l.b16 %v502
    %v574 = vunpack.c.l.b16 %v503
    %v575 = vunpack.c.l.b16 %v504
    %v576 = vunpack.c.l.b16 %v505
    %v577 = vunpack.c.l.b16 %v506
    %v578 = vunpack.c.l.b16 %v507
    %v579 = vunpack.c.l.b16 %v508
    %v580 = vunpack.c.l.b16 %v509
    %v581 = vunpack.c.l.b16 %v510
    %v582 = vunpack.c.l.b16 %v511
    %v583 = vpack.c.b16 %v552, %v551
    %v584 = vpack.c.b16 %v554, %v553
    %v585 = vpack.c.b16 %v556, %v555
    %v586 = vpack.c.b16 %v558, %v557
    %v587 = vpack.c.b16 %v560, %v559
    %v588 = vpack.c.b16 %v562, %v561
    %v589 = vpack.c.b16 %v564, %v563
    %v590 = vpack.c.b16 %v566, %v565
    %v591 = vpack.c.b16 %v568, %v567
    %v592 = vpack.c.b16 %v570, %v569
    %v593 = vpack.c.b16 %v572, %v571
    %v594 = vpack.c.b16 %v574, %v573
    %v595 = vpack.c.b16 %v576, %v575
    %v596 = vpack.c.b16 %v578, %v577
    %v597 = vpack.c.b16 %v580, %v579
    %v598 = vpack.c.b16 %v582, %v581
    %615 = vmatprep.subr.bf16.mxu0 0
    %616 = vmatpush1.bf16.msra.mxu0 %v590
    %617 = vmatprep.subr.bf16.mxu0 0
    %618 = vmatpush1.bf16.msra.mxu0 %v589
    %619 = vmatprep.subr.bf16.mxu0 0
    %620 = vmatpush1.bf16.msra.mxu0 %v588
    %621 = vmatprep.subr.bf16.mxu0 0
    %622 = vmatpush1.bf16.msra.mxu0 %v587
    %623 = vmatprep.subr.bf16.mxu0 0
    %624 = vmatpush1.bf16.msra.mxu0 %v586
    %625 = vmatprep.subr.bf16.mxu0 0
    %626 = vmatpush1.bf16.msra.mxu0 %v585
    %627 = vmatprep.subr.bf16.mxu0 0
    %628 = vmatpush1.bf16.msra.mxu0 %v584
    %629 = vmatprep.subr.bf16.mxu0 0
    %630 = vmatpush1.bf16.msra.mxu0 %v583
    %631 = vmatprep.subr.bf16.mxu0 0
    %632 = vmatpush2.bf16.msra.mxu0 %v598
    %633 = vmatprep.subr.bf16.mxu0 0
    %634 = vmatpush2.bf16.msra.mxu0 %v597
    %635 = vmatprep.subr.bf16.mxu0 0
    %636 = vmatpush2.bf16.msra.mxu0 %v596
    %637 = vmatprep.subr.bf16.mxu0 0
    %638 = vmatpush2.bf16.msra.mxu0 %v595
    %639 = vmatprep.subr.bf16.mxu0 0
    %640 = vmatpush2.bf16.msra.mxu0 %v594
    %641 = vmatprep.subr.bf16.mxu0 0
    %642 = vmatpush2.bf16.msra.mxu0 %v593
    %643 = vmatprep.subr.bf16.mxu0 0
    %644 = vmatpush2.bf16.msra.mxu0 %v592
    %645 = vmatprep.subr.bf16.mxu0 0
    %646 = vmatpush2.bf16.msra.mxu0 %v591
    %647 = vmatprep.mubr.bf16.mxu0 %v479
    %648 = vmatmul.mubr.bf16.gmra.mxu0 %v478
    %v649 = vpop.f32.mrf.mxu0
    %v650 = vadd.f32 %v517, %v649
    %v651 = vpop.f32.mrf.mxu0
    %v652 = vpop.f32.mrf.mxu0
    %v653 = vpop.f32.mrf.mxu0
    %654 = vdwg.mxu0
    %v655 = vmax.f32 %v650, 0.0
    %v656 = vpack.c.bf16 %v655, %v655
    %v657 = vld [vmem:[#allocation8] sm:$0xf]
    %v658 = vld [vmem:[#allocation8 + $0x4] sm:$0xf]
    %v659 = vld [vmem:[#allocation8 + $0x8] sm:$0xf]
    %v660 = vld [vmem:[#allocation8 + $0xc] sm:$0xf]
    %v661 = vld [vmem:[#allocation8 + $0x10] sm:$0xf]
    %v662 = vld [vmem:[#allocation8 + $0x14] sm:$0xf]
    %v663 = vld [vmem:[#allocation8 + $0x18] sm:$0xf]
    %v664 = vld [vmem:[#allocation8 + $0x1c] sm:$0xf]
    %v665 = vld [vmem:[#allocation8 + $0x20] sm:$0xf]
    %v666 = vld [vmem:[#allocation8 + $0x24] sm:$0xf]
    %v667 = vld [vmem:[#allocation8 + $0x28] sm:$0xf]
    %v668 = vld [vmem:[#allocation8 + $0x2c] sm:$0xf]
    %v669 = vld [vmem:[#allocation8 + $0x30] sm:$0xf]
    %v670 = vld [vmem:[#allocation8 + $0x34] sm:$0xf]
    %v671 = vld [vmem:[#allocation8 + $0x38] sm:$0xf]
    %v672 = vld [vmem:[#allocation8 + $0x3c] sm:$0xf]
    %v673 = vld [vmem:[%s6] sm:$0x1]
    %v675 = vlaneseq
    %v676 = vshrl.u32 %v675, 7
    %v677 = vsub.s32 0, %v676
    %v678 = vrot.slane %v673, %v677
    %v696 = vunpack.c.l.b16 %v657
    %v697 = vunpack.c.l.b16 %v658
    %v698 = vunpack.c.l.b16 %v659
    %v699 = vunpack.c.l.b16 %v660
    %v700 = vunpack.c.l.b16 %v661
    %v701 = vunpack.c.l.b16 %v662
    %v702 = vunpack.c.l.b16 %v663
    %v703 = vunpack.c.l.b16 %v664
    %v704 = vunpack.c.l.b16 %v665
    %v705 = vunpack.c.l.b16 %v666
    %v706 = vunpack.c.l.b16 %v667
    %v707 = vunpack.c.l.b16 %v668
    %v708 = vunpack.c.l.b16 %v669
    %v709 = vunpack.c.l.b16 %v670
    %v710 = vunpack.c.l.b16 %v671
    %v711 = vunpack.c.l.b16 %v672
    %v712 = vpack.c.b16 %v697, %v696
    %v713 = vpack.c.b16 %v699, %v698
    %v714 = vpack.c.b16 %v701, %v700
    %v715 = vpack.c.b16 %v703, %v702
    %v716 = vpack.c.b16 %v705, %v704
    %v717 = vpack.c.b16 %v707, %v706
    %v718 = vpack.c.b16 %v709, %v708
    %v719 = vpack.c.b16 %v711, %v710
    %728 = vmatprep.subr.bf16.mxu0 0
    %729 = vmatpush1.bf16.msra.mxu0 %v719
    %730 = vmatprep.subr.bf16.mxu0 0
    %731 = vmatpush1.bf16.msra.mxu0 %v718
    %732 = vmatprep.subr.bf16.mxu0 0
    %733 = vmatpush1.bf16.msra.mxu0 %v717
    %734 = vmatprep.subr.bf16.mxu0 0
    %735 = vmatpush1.bf16.msra.mxu0 %v716
    %736 = vmatprep.subr.bf16.mxu0 0
    %737 = vmatpush1.bf16.msra.mxu0 %v715
    %738 = vmatprep.subr.bf16.mxu0 0
    %739 = vmatpush1.bf16.msra.mxu0 %v714
    %740 = vmatprep.subr.bf16.mxu0 0
    %741 = vmatpush1.bf16.msra.mxu0 %v713
    %742 = vmatprep.subr.bf16.mxu0 0
    %743 = vmatpush1.bf16.msra.mxu0 %v712
    %744 = vmatprep.subr.bf16.mxu0 0
    %745 = vmatpush2.bf16.msra.mxu0 0
    %746 = vmatprep.subr.bf16.mxu0 0
    %747 = vmatpush2.bf16.msra.mxu0 0
    %748 = vmatprep.subr.bf16.mxu0 0
    %749 = vmatpush2.bf16.msra.mxu0 0
    %750 = vmatprep.subr.bf16.mxu0 0
    %751 = vmatpush2.bf16.msra.mxu0 0
    %752 = vmatprep.subr.bf16.mxu0 0
    %753 = vmatpush2.bf16.msra.mxu0 0
    %754 = vmatprep.subr.bf16.mxu0 0
    %755 = vmatpush2.bf16.msra.mxu0 0
    %756 = vmatprep.subr.bf16.mxu0 0
    %757 = vmatpush2.bf16.msra.mxu0 0
    %758 = vmatprep.subr.bf16.mxu0 0
    %759 = vmatpush2.bf16.msra.mxu0 0
    %760 = vmatprep.mubr.bf16.mxu0 0
    %761 = vmatmul.mubr.bf16.gmra.mxu0 %v656
    %v762 = vpop.f32.mrf.mxu0
    %v763 = vadd.f32 %v678, %v762
    %v764 = vpop.f32.mrf.mxu0
    %v765 = vpop.f32.mrf.mxu0
    %v766 = vpop.f32.mrf.mxu0
    %767 = vdwg.mxu0
    %768 = vst [vmem:[#allocation10] sm:$0xff] %v763
    // Predicated region
    $region46: #{tpu_custom_call.1} parent=1 // pred_check
      _
    $region47: #{tpu_custom_call.1} parent=1 // pred_check_branch
      %770 = sbr.rel (0) target = $region49
    $region48: #{tpu_custom_call.1} parent=1 // pred_region
      %s772 = ssub.s32 128, 128
      %773 = vsyncadd [#allocation4], %s772
      %s775 = sshll.u32 [#allocation10], 4
      %s776 = int_to_ptr.vmem [resolvable:$true] %s775
      %778 = dma.vmem_to_hbm [thread:$0]  %s776, 128, %s7, [#allocation4]
    $region49: #{tpu_custom_call.1} parent=1 // pred_fallthru
      _
    // Predicated region
    $region50: #{tpu_custom_call.1} parent=1 // pred_check
      _
    $region51: #{tpu_custom_call.1} parent=1 // pred_check_branch
      %780 = sbr.rel (0) target = $region53
    $region52: #{tpu_custom_call.1} parent=1 // pred_region
      %781 = dma.done [#allocation4], 128
    $region53: #{tpu_custom_call.1} parent=1 // pred_fallthru
      _
    %782 = vsyncpa [#allocation3], 1
    %783 = vsyncpa [#allocation6], 1
    %784 = vsyncpa [#allocation9], 1
    %785 = vsyncpa [#allocation4], 1

</llo_original>
